<compile_context>
chip_gen: v7x
topology: tpu7x:2x2x1
jax: 0.10.0
libtpu: 0.0.40
codegen_flags: <defaults>
</compile_context>

<pallas_src>
import jax
import jax.numpy as jnp
import numpy as np
from jax.experimental import pallas as pl
from jax.experimental.pallas import tpu as pltpu


def _round_up(x, m):
    return ((x + m - 1) // m) * m


def _choose_tiling(bsz, max_tb=256):
    """Pad the batch to a multiple of 16 (bf16 sublane pack) and split it into
    equal tiles of <= max_tb rows.

    * even tile count (when >1) balances real work across v7x's 2 TensorCores
    * a single tile avoids per-grid-step overhead on single-TC v5e/v6e for
      small batches
    Returns (padded_batch, tile_rows, num_tiles)."""
    b16 = _round_up(bsz, 16)
    nt = pl.cdiv(b16, max_tb)
    if nt > 1 and nt % 2:
        nt += 1                     # balanced split across 2 TCs on v7x
    tb = _round_up(pl.cdiv(b16, nt), 16)
    return nt * tb, tb, nt


def _ann_kernel(x_ref, wmt_ref, b_ref, xhat_ref, lp_ref):
    """Fused autoregressive forward + per-sample log-prob for one batch tile.

    x_ref:    [TB, N] bf16 spins in {-1, +1}
    wmt_ref:  [N, N]  bf16 pre-masked, pre-transposed weights (W * tril(-1)).T
    b_ref:    [1, N]  f32 bias
    xhat_ref: [TB, N] bf16 sigmoid conditionals
    lp_ref:   [TB, 1] f32 per-sample log probability
    """
    x_bf = x_ref[...]

    # MXU matmul: bf16 inputs, f32 accumulation.
    logits = jnp.dot(x_bf, wmt_ref[...],
                     preferred_element_type=jnp.float32) + b_ref[...]

    # One exp shared between sigmoid and log_sigmoid:
    #   e = exp(-|z|)
    #   sigmoid(z)     = where(z >= 0, 1, e) / (1 + e)
    #   log_sigmoid(t) = min(t, 0) - log1p(e)   with t = x*z and |t| == |z|
    # (x is exactly +-1, so |x*z| == |z|; stable, no EPS needed).
    e = jnp.exp(-jnp.abs(logits))
    inv = pl.reciprocal(1.0 + e, approx=True)      # EUP, ~free
    xhat_ref[...] = (jnp.where(logits >= 0.0, 1.0, e) * inv).astype(xhat_ref.dtype)

    t = x_bf.astype(jnp.float32) * logits
    lp_elem = jnp.minimum(t, 0.0) - jnp.log1p(e)
    lp_ref[...] = jnp.sum(lp_elem, axis=1, keepdims=True).astype(lp_ref.dtype)


@jax.jit
def ann_forward_log_prob(x, w, b):
    """Returns (x_hat [B, N] bf16, log_prob [B] f32)."""
    bsz, n = x.shape

    # Hoist autoregressive mask + transpose out of the hot path (done once per
    # call, amortized over all batch tiles).
    mask = jnp.tril(jnp.ones((n, n), jnp.float32), k=-1)
    wmt = (w * mask).T.astype(jnp.bfloat16)
    b2d = b.reshape(1, n).astype(jnp.float32)

    b_pad, tb, nt = _choose_tiling(bsz)
    x_p = x.astype(jnp.bfloat16)
    if b_pad != bsz:
        x_p = jnp.pad(x_p, ((0, b_pad - bsz), (0, 0)), constant_values=1.0)

    grid = (nt,)

    cost = pl.CostEstimate(
        flops=2 * b_pad * n * n,
        transcendentals=2 * b_pad * n,               # exp + log1p (rcp ~free)
        bytes_accessed=(x_p.size * 2 + wmt.size * 2 + b2d.size * 4
                        + b_pad * n * 2 + b_pad * 4),
    )

    x_hat, lp = pl.pallas_call(
        _ann_kernel,
        out_shape=(
            jax.ShapeDtypeStruct((b_pad, n), jnp.bfloat16),
            jax.ShapeDtypeStruct((b_pad, 1), jnp.float32),
        ),
        grid=grid,
        in_specs=[
            pl.BlockSpec((tb, n), lambda i: (i, 0)),   # x tile (pipelined)
            pl.BlockSpec((n, n), lambda i: (0, 0)),    # masked W^T (resident)
            pl.BlockSpec((1, n), lambda i: (0, 0)),    # bias (resident)
        ],
        out_specs=(
            pl.BlockSpec((tb, n), lambda i: (i, 0)),
            pl.BlockSpec((tb, 1), lambda i: (i, 0)),
        ),
        compiler_params=pltpu.CompilerParams(
            dimension_semantics=("parallel",),   # shard tiles across v7x's 2 TCs
            vmem_limit_bytes=32 * 1024 * 1024,   # stays inside v7x's 64 MiB VMEM
        ),
        cost_estimate=cost,
    )(x_p, wmt, b2d)
    return x_hat[:bsz], lp[:bsz, 0]


def _reference(x, w, b):
    """Pure-JAX reference (same bf16-quantized operands, stable log-prob).

    NOTE: tolerances in the test are relative to this bf16-operand path, not
    the true f32 PyTorch model; expect ~1e-3-level drift vs pure f32."""
    n = w.shape[0]
    mask = jnp.tril(jnp.ones((n, n), jnp.float32), k=-1)
    wmt = (w * mask).T.astype(jnp.bfloat16)
    logits = jnp.dot(x.astype(jnp.bfloat16), wmt,
                     preferred_element_type=jnp.float32) + b[None, :]
    x_hat = jax.nn.sigmoid(logits)
    lp = jnp.sum(jax.nn.log_sigmoid(x * logits), axis=1)
    return x_hat, lp


if __name__ == "__main__":
    # Batch not a multiple of the tile -> exercises padding + a balanced
    # 2-step grid (300 -> 320 rows, 2 tiles of 160).
    B, N = 300, 128

    key = jax.random.PRNGKey(0)
    kx, kw, kb = jax.random.split(key, 3)

    x = jax.random.bernoulli(kx, 0.5, (B, N)).astype(jnp.float32) * 2.0 - 1.0
    w = jax.random.normal(kw, (N, N), jnp.float32) * (1.0 / np.sqrt(N))
    b = jax.random.normal(kb, (N,), jnp.float32) * 0.01

    x_hat, log_prob = ann_forward_log_prob(x, w, b)
    jax.block_until_ready((x_hat, log_prob))

    x_hat_ref, log_prob_ref = _reference(x, w, b)
    # x_hat is emitted in bf16 (+ approx reciprocal) -> bf16-level tolerances.
    np.testing.assert_allclose(np.asarray(x_hat, dtype=np.float32),
                               np.asarray(x_hat_ref),
                               rtol=2e-2, atol=1e-2)
    np.testing.assert_allclose(np.asarray(log_prob), np.asarray(log_prob_ref),
                               rtol=1e-4, atol=1e-3)

    print("KERNEL_OK")
</pallas_src>

<mosaic_0001>
module attributes {stable_mosaic.version = 11 : i64} {
  func.func @_ann_kernel(%arg0: i32, %arg1: memref<160x128xbf16, #tpu.memory_space<vmem>>, %arg2: memref<128x128xbf16, #tpu.memory_space<vmem>>, %arg3: memref<1x128xf32, #tpu.memory_space<vmem>>, %arg4: memref<160x128xbf16, #tpu.memory_space<vmem>>, %arg5: memref<160x1xf32, #tpu.memory_space<vmem>>) attributes {dimension_semantics = [#tpu.dimension_semantics<parallel>], iteration_bounds = array<i64: 2>, scalar_prefetch = 0 : i64, scratch_operands = 0 : i64, tpu.core_type = #tpu.core_type<tc>, window_params = [{transform_indices = @transform_0, window_bounds = array<i64: 160, 128>}, {pipeline_mode = #tpu.pipeline_mode<synchronous>, transform_indices = @transform_1, window_bounds = array<i64: 128, 128>}, {pipeline_mode = #tpu.pipeline_mode<synchronous>, transform_indices = @transform_2, window_bounds = array<i64: 1, 128>}, {transform_indices = @transform_3, window_bounds = array<i64: 160, 128>}, {transform_indices = @transform_4, window_bounds = array<i64: 160, 1>}]} {
    %c0 = arith.constant 0 : index
    %c0_0 = arith.constant 0 : index
    %0 = vector.load %arg1[%c0, %c0_0] : memref<160x128xbf16, #tpu.memory_space<vmem>>, vector<160x128xbf16>
    %c0_1 = arith.constant 0 : index
    %c0_2 = arith.constant 0 : index
    %1 = vector.load %arg2[%c0_1, %c0_2] : memref<128x128xbf16, #tpu.memory_space<vmem>>, vector<128x128xbf16>
    %cst = arith.constant dense<0.000000e+00> : vector<160x128xf32>
    %2 = tpu.matmul %0, %1, %cst {dimension_numbers = #tpu.dot_dimension_numbers<[1], [0], [0], [1], [0, 0, 1, 1], [], []>} : vector<160x128xbf16>, vector<128x128xbf16>, vector<160x128xf32> -> vector<160x128xf32>
    %c0_3 = arith.constant 0 : index
    %c0_4 = arith.constant 0 : index
    %3 = vector.load %arg3[%c0_3, %c0_4] : memref<1x128xf32, #tpu.memory_space<vmem>>, vector<1x128xf32>
    %4 = vector.broadcast %3 : vector<1x128xf32> to vector<160x128xf32>
    %5 = arith.addf %2, %4 : vector<160x128xf32>
    %6 = math.absf %5 : vector<160x128xf32>
    %cst_5 = arith.constant 0.000000e+00 : f32
    %7 = vector.broadcast %cst_5 : f32 to vector<160x128xf32>
    %8 = arith.subf %7, %6 : vector<160x128xf32>
    %9 = math.exp %8 : vector<160x128xf32>
    %cst_6 = arith.constant 1.000000e+00 : f32
    %10 = vector.broadcast %cst_6 : f32 to vector<160x128xf32>
    %11 = arith.addf %10, %9 : vector<160x128xf32>
    %12 = tpu.reciprocal %11 {approx = true} : vector<160x128xf32> -> vector<160x128xf32>
    %cst_7 = arith.constant 0.000000e+00 : f32
    %13 = vector.broadcast %cst_7 : f32 to vector<160x128xf32>
    %14 = arith.cmpf oge, %5, %13 : vector<160x128xf32>
    %cst_8 = arith.constant 1.000000e+00 : f32
    %15 = vector.broadcast %cst_8 : f32 to vector<160x128xf32>
    %16 = arith.select %14, %15, %9 : vector<160x128xi1>, vector<160x128xf32>
    %17 = arith.mulf %16, %12 : vector<160x128xf32>
    %18 = arith.truncf %17 : vector<160x128xf32> to vector<160x128xbf16>
    %c0_9 = arith.constant 0 : index
    %c0_10 = arith.constant 0 : index
    %19 = vector.load %arg4[%c0_9, %c0_10] : memref<160x128xbf16, #tpu.memory_space<vmem>>, vector<160x128xbf16>
    tpu.vector_store %arg4[%c0_9, %c0_10], %18 {strides = array<i32>} : memref<160x128xbf16, #tpu.memory_space<vmem>>, vector<160x128xbf16>,
    %20 = arith.extf %0 : vector<160x128xbf16> to vector<160x128xf32>
    %21 = arith.mulf %20, %5 : vector<160x128xf32>
    %cst_11 = arith.constant 0.000000e+00 : f32
    %22 = vector.broadcast %cst_11 : f32 to vector<160x128xf32>
    %23 = arith.minimumf %21, %22 : vector<160x128xf32>
    %24 = math.log1p %9 : vector<160x128xf32>
    %25 = arith.subf %23, %24 : vector<160x128xf32>
    %cst_12 = arith.constant dense<0.000000e+00> : vector<160xf32>
    %26 = vector.multi_reduction <add>, %25, %cst_12 [1] : vector<160x128xf32> to vector<160xf32>
    %27 = vector.shape_cast %26 : vector<160xf32> to vector<160x1xf32>
    %c0_13 = arith.constant 0 : index
    %c0_14 = arith.constant 0 : index
    %28 = vector.load %arg5[%c0_13, %c0_14] : memref<160x1xf32, #tpu.memory_space<vmem>>, vector<160x1xf32>
    tpu.vector_store %arg5[%c0_13, %c0_14], %27 {strides = array<i32>} : memref<160x1xf32, #tpu.memory_space<vmem>>, vector<160x1xf32>,
    return
  }
  func.func @transform_0(%arg0: i32) -> (i32, i32) {
    %c0_i32 = arith.constant 0 : i32
    %c0_i32_0 = arith.constant 0 : i32
    return %arg0, %c0_i32 : i32, i32
  }
  func.func @transform_1(%arg0: i32) -> (i32, i32) {
    %c0_i32 = arith.constant 0 : i32
    %c0_i32_0 = arith.constant 0 : i32
    %c0_i32_1 = arith.constant 0 : i32
    return %c0_i32, %c0_i32_0 : i32, i32
  }
  func.func @transform_2(%arg0: i32) -> (i32, i32) {
    %c0_i32 = arith.constant 0 : i32
    %c0_i32_0 = arith.constant 0 : i32
    %c0_i32_1 = arith.constant 0 : i32
    return %c0_i32, %c0_i32_0 : i32, i32
  }
  func.func @transform_3(%arg0: i32) -> (i32, i32) {
    %c0_i32 = arith.constant 0 : i32
    %c0_i32_0 = arith.constant 0 : i32
    return %arg0, %c0_i32 : i32, i32
  }
  func.func @transform_4(%arg0: i32) -> (i32, i32) {
    %c0_i32 = arith.constant 0 : i32
    %c0_i32_0 = arith.constant 0 : i32
    return %arg0, %c0_i32 : i32, i32
  }
}

</mosaic_0001>

<llo_original>
// kernel: ann_forward_log_prob.1
$region0: #{ann_forward_log_prob.1}
  #allocation0 [shape = 'u32[]', space=smem, size = 0x4, offset = 0x4, fixed_abs, tag = 'smem constant byte address 0x4 - core index']
  #allocation1 [shape = 'u32[144,128]{1,0:T(1,128)}', space=vmem, size = 0x12000, scoped, tag = 'internal scratch']
  %s0 = inlined_call_operand.vmem [shape: bf16[320,128], index: 0, kind: input, shape index: {}]
  %s1 = inlined_call_operand.vmem [shape: bf16[128,128], index: 1, kind: input, shape index: {}]
  %s2 = inlined_call_operand.vmem [shape: f32[1,128], index: 2, kind: input, shape index: {}]
  %s3 = inlined_call_operand.vmem [shape: bf16[320,128], index: 3, kind: output, shape index: {0}]
  %s4 = inlined_call_operand.vmem [shape: f32[320,1], index: 4, kind: output, shape index: {1}]
  %5 = xla_tuple %s3, %s4
  %s6 = sld [smem:[#allocation0]]
  $region53: #{ann_forward_log_prob.1} parent=0
    _
  %s8 = ssub.s32 1, %s6
  %s9 = scalar_select 0, %s8, %s6
  loop: start=0, step=1, limit=4
  $region2: #{ann_forward_log_prob.1} parent=0 // loop_pre_header
    _
  $region3: #{ann_forward_log_prob.1} parent=0 // loop_header
    %s11 = sphi 0, %s15
    %p12 = scmp.ge.s32.totalorder %s11, 4
    %s21 = sphi 0, %s23
    %s24 = sphi 0, %s21
    %s25 = sphi 0, %s24
    %s41 = sphi 0, %s25
    %s45 = sphi 0, %s45
    %s47 = sphi 0, %s45
    %s48 = sphi 0, %s47
    %s62 = sphi 0, %s48
    %s66 = sphi 0, %s66
    %s68 = sphi 0, %s66
    %s69 = sphi 0, %s68
    %s83 = sphi 0, %s69
    %s89 = sphi 0, %s91
    %s92 = sphi 0, %s89
    %s93 = sphi 0, %s92
    %s109 = sphi 0, %s93
    %s115 = sphi 0, %s117
    %s118 = sphi 0, %s115
    %s119 = sphi 0, %s118
    %s135 = sphi 0, %s119
  $region4: #{ann_forward_log_prob.1} parent=0 // loop_header_branch
    %14 = sbr.rel (%p12) target = $region8
  $region5: #{ann_forward_log_prob.1} parent=0 // loop_body
    %s16 = ssub.s32 %s11, 1
    %s17 = ssub.s32 %s11, 2
    %s18 = sadd.s32 %s11, 1
    %s19 = ssub.s32 %s11, %s18
    %p20 = scmp.eq.s32.totalorder %s19, 0
    %s22 = sadd.s32 %s21, 1
    %s23 = scalar_select %p20, %s21, %s22
    %p26 = pneg %p20
    %p27 = scmp.eq.s32.totalorder %s11, 1
    %p28 = por %p26, %p27
    %p29 = scmp.ne.s32.totalorder %s21, %s24
    %p30 = scmp.eq.s32.totalorder %s11, 0
    %p31 = por %p29, %p30
    %p32 = scmp.ne.s32.totalorder %s21, %s24
    %p33 = scmp.eq.s32.totalorder %s16, 1
    %p34 = por %p32, %p33
    %p35 = scmp.ne.s32.totalorder %s24, %s25
    %p36 = scmp.eq.s32.totalorder %s16, 0
    %p37 = por %p35, %p36
    %p38 = scmp.ne.s32.totalorder %s24, %s25
    %p39 = scmp.eq.s32.totalorder %s17, 1
    %p40 = por %p38, %p39
    %p42 = scmp.ne.s32.totalorder %s25, %s41
    %p43 = scmp.eq.s32.totalorder %s17, 0
    %p44 = por %p42, %p43
    %s46 = sadd.s32 %s45, 1
    %p49 = scmp.eq.s32.totalorder %s11, 1
    %p50 = scmp.ne.s32.totalorder %s45, %s47
    %p51 = scmp.eq.s32.totalorder %s11, 0
    %p52 = por %p50, %p51
    %p53 = scmp.ne.s32.totalorder %s45, %s47
    %p54 = scmp.eq.s32.totalorder %s16, 1
    %p55 = por %p53, %p54
    %p56 = scmp.ne.s32.totalorder %s47, %s48
    %p57 = scmp.eq.s32.totalorder %s16, 0
    %p58 = por %p56, %p57
    %p59 = scmp.ne.s32.totalorder %s47, %s48
    %p60 = scmp.eq.s32.totalorder %s17, 1
    %p61 = por %p59, %p60
    %p63 = scmp.ne.s32.totalorder %s48, %s62
    %p64 = scmp.eq.s32.totalorder %s17, 0
    %p65 = por %p63, %p64
    %s67 = sadd.s32 %s66, 1
    %p70 = scmp.eq.s32.totalorder %s11, 1
    %p71 = scmp.ne.s32.totalorder %s66, %s68
    %p72 = scmp.eq.s32.totalorder %s11, 0
    %p73 = por %p71, %p72
    %p74 = scmp.ne.s32.totalorder %s66, %s68
    %p75 = scmp.eq.s32.totalorder %s16, 1
    %p76 = por %p74, %p75
    %p77 = scmp.ne.s32.totalorder %s68, %s69
    %p78 = scmp.eq.s32.totalorder %s16, 0
    %p79 = por %p77, %p78
    %p80 = scmp.ne.s32.totalorder %s68, %s69
    %p81 = scmp.eq.s32.totalorder %s17, 1
    %p82 = por %p80, %p81
    %p84 = scmp.ne.s32.totalorder %s69, %s83
    %p85 = scmp.eq.s32.totalorder %s17, 0
    %p86 = por %p84, %p85
    %s87 = ssub.s32 %s11, %s18
    %p88 = scmp.eq.s32.totalorder %s87, 0
    %s90 = sadd.s32 %s89, 1
    %s91 = scalar_select %p88, %s89, %s90
    %p94 = pneg %p88
    %p95 = scmp.eq.s32.totalorder %s11, 1
    %p96 = por %p94, %p95
    %p97 = scmp.ne.s32.totalorder %s89, %s92
    %p98 = scmp.eq.s32.totalorder %s11, 0
    %p99 = por %p97, %p98
    %p100 = scmp.ne.s32.totalorder %s89, %s92
    %p101 = scmp.eq.s32.totalorder %s16, 1
    %p102 = por %p100, %p101
    %p103 = scmp.ne.s32.totalorder %s92, %s93
    %p104 = scmp.eq.s32.totalorder %s16, 0
    %p105 = por %p103, %p104
    %p106 = scmp.ne.s32.totalorder %s92, %s93
    %p107 = scmp.eq.s32.totalorder %s17, 1
    %p108 = por %p106, %p107
    %p110 = scmp.ne.s32.totalorder %s93, %s109
    %p111 = scmp.eq.s32.totalorder %s17, 0
    %p112 = por %p110, %p111
    %s113 = ssub.s32 %s11, %s18
    %p114 = scmp.eq.s32.totalorder %s113, 0
    %s116 = sadd.s32 %s115, 1
    %s117 = scalar_select %p114, %s115, %s116
    %p120 = pneg %p114
    %p121 = scmp.eq.s32.totalorder %s11, 1
    %p122 = por %p120, %p121
    %p123 = scmp.ne.s32.totalorder %s115, %s118
    %p124 = scmp.eq.s32.totalorder %s11, 0
    %p125 = por %p123, %p124
    %p126 = scmp.ne.s32.totalorder %s115, %s118
    %p127 = scmp.eq.s32.totalorder %s16, 1
    %p128 = por %p126, %p127
    %p129 = scmp.ne.s32.totalorder %s118, %s119
    %p130 = scmp.eq.s32.totalorder %s16, 0
    %p131 = por %p129, %p130
    %p132 = scmp.ne.s32.totalorder %s118, %s119
    %p133 = scmp.eq.s32.totalorder %s17, 1
    %p134 = por %p132, %p133
    %p136 = scmp.ne.s32.totalorder %s119, %s135
    %p137 = scmp.eq.s32.totalorder %s17, 0
    %p138 = por %p136, %p137
    %p139 = scmp.le.s32.totalorder 1, %s11
    %p140 = scmp.lt.s32.totalorder %s11, 3
    %p141 = pnand %p139, %p140
    %p142 = pneg %p141
    // Predicated region
    $region9: #{ann_forward_log_prob.1} parent=5 // pred_check
      _
    $region10: #{ann_forward_log_prob.1} parent=5 // pred_check_branch
      %144 = sbr.rel (%p141) target = $region12
    $region11: #{ann_forward_log_prob.1} parent=5 // pred_region
      %s145 = ssub.s32 %s11, 1
      // Predicated region
      $region13: #{ann_forward_log_prob.1} parent=11 // pred_check
        %p146 = pneg %p58
      $region14: #{ann_forward_log_prob.1} parent=11 // pred_check_branch
        %148 = sbr.rel (%p146) target = $region16
      $region15: #{ann_forward_log_prob.1} parent=11 // pred_region
        _
      $region16: #{ann_forward_log_prob.1} parent=11 // pred_fallthru
        _
      // Predicated region
      $region17: #{ann_forward_log_prob.1} parent=11 // pred_check
        %p149 = pneg %p79
      $region18: #{ann_forward_log_prob.1} parent=11 // pred_check_branch
        %151 = sbr.rel (%p149) target = $region20
      $region19: #{ann_forward_log_prob.1} parent=11 // pred_region
        _
      $region20: #{ann_forward_log_prob.1} parent=11 // pred_fallthru
        _
    $region12: #{ann_forward_log_prob.1} parent=5 // pred_fallthru
      _
    %p152 = scmp.lt.s32.totalorder %s11, 2
    // Predicated region
    $region21: #{ann_forward_log_prob.1} parent=5 // pred_check
      %p153 = pneg %p152
    $region22: #{ann_forward_log_prob.1} parent=5 // pred_check_branch
      %155 = sbr.rel (%p153) target = $region24
    $region23: #{ann_forward_log_prob.1} parent=5 // pred_region
      // Predicated region
      $region25: #{ann_forward_log_prob.1} parent=23 // pred_check
        %p156 = pneg %p31
      $region26: #{ann_forward_log_prob.1} parent=23 // pred_check_branch
        %158 = sbr.rel (%p156) target = $region28
      $region27: #{ann_forward_log_prob.1} parent=23 // pred_region
        %s159 = smul.u32 20, %s11
        %p160 = scmp.lt.s32.totalorder %s159, 39
        %s161 = scalar_select %p160, %s159, 39
        %s162 = smul.addr %s161, 4
        %s163 = scalar_lea.vmem %s0, %s162
        %s164 = smul.u32 20, %s11
      $region28: #{ann_forward_log_prob.1} parent=23 // pred_fallthru
        _
    $region24: #{ann_forward_log_prob.1} parent=5 // pred_fallthru
      _
    %p165 = scmp.le.s32.totalorder 1, %s11
    %p166 = scmp.lt.s32.totalorder %s11, 3
    %p167 = pnand %p165, %p166
    %p168 = pneg %p167
    // Predicated region
    $region29: #{ann_forward_log_prob.1} parent=5 // pred_check
      _
    $region30: #{ann_forward_log_prob.1} parent=5 // pred_check_branch
      %170 = sbr.rel (%p167) target = $region32
    $region31: #{ann_forward_log_prob.1} parent=5 // pred_region
      %s171 = ssub.s32 %s11, 1
      %s172 = smul.u32 20, %s16
      %p173 = scmp.lt.s32.totalorder %s172, 39
      %s174 = scalar_select %p173, %s172, 39
      %s175 = smul.addr %s174, 4
      %s176 = scalar_lea.vmem %s0, %s175
      %p177 = pneg %p37
      %p178 = pneg %p34
      %p179 = pneg %p58
      %p180 = pneg %p55
      %p181 = pneg %p79
      %p182 = pneg %p76
      %p183 = pneg %p105
      %p184 = pneg %p102
      %s185 = smul.u32 20, %s16
      %p186 = scmp.lt.s32.totalorder %s185, 39
      %s187 = scalar_select %p186, %s185, 39
      %s188 = smul.addr %s187, 4
      %s189 = scalar_lea.vmem %s3, %s188
      %p190 = pneg %p131
      %p191 = pneg %p128
      %s192 = smul.u32 20, %s16
      %p193 = scmp.lt.s32.totalorder %s192, 39
      %s194 = scalar_select %p193, %s192, 39
      %s195 = smul.addr %s194, 8
      %s196 = scalar_lea.vmem %s4, %s195
      %s197 = smul.u32 20, %s16
      %p198 = scmp.lt.s32.totalorder %s197, 39
      %s199 = scalar_select %p198, %s197, 39
      %s200 = smul.addr %s199, 4
      %s201 = scalar_lea.vmem %s0, %s200
      %s202 = smul.u32 20, %s16
      %s203 = smul.u32 20, %s16
      %p204 = scmp.lt.s32.totalorder %s203, 39
      %s205 = scalar_select %p204, %s203, 39
      %s206 = smul.addr %s205, 4
      %s207 = scalar_lea.vmem %s3, %s206
      %s208 = smul.u32 20, %s16
      %s209 = smul.u32 20, %s16
      %p210 = scmp.lt.s32.totalorder %s209, 39
      %s211 = scalar_select %p210, %s209, 39
      %s212 = smul.addr %s211, 8
      %s213 = scalar_lea.vmem %s4, %s212
      %s214 = smul.u32 20, %s16
      %v216 = vld [vmem:[%s201] sm:$0xf]
      %v217 = vld [vmem:[%s201 + $0x4] sm:$0xf]
      %v218 = vld [vmem:[%s201 + $0x8] sm:$0xf]
      %v219 = vld [vmem:[%s201 + $0xc] sm:$0xf]
      %v220 = vld [vmem:[%s201 + $0x10] sm:$0xf]
      %v221 = vld [vmem:[%s201 + $0x14] sm:$0xf]
      %v222 = vld [vmem:[%s201 + $0x18] sm:$0xf]
      %v223 = vld [vmem:[%s201 + $0x1c] sm:$0xf]
      %v224 = vld [vmem:[%s201 + $0x20] sm:$0xf]
      %v225 = vld [vmem:[%s201 + $0x24] sm:$0xf]
      %v226 = vld [vmem:[%s201 + $0x28] sm:$0xf]
      %v227 = vld [vmem:[%s201 + $0x2c] sm:$0xf]
      %v228 = vld [vmem:[%s201 + $0x30] sm:$0xf]
      %v229 = vld [vmem:[%s201 + $0x34] sm:$0xf]
      %v230 = vld [vmem:[%s201 + $0x38] sm:$0xf]
      %v231 = vld [vmem:[%s201 + $0x3c] sm:$0xf]
      %v232 = vld [vmem:[%s201 + $0x40] sm:$0xf]
      %v233 = vld [vmem:[%s201 + $0x44] sm:$0xf]
      %v234 = vld [vmem:[%s201 + $0x48] sm:$0xf]
      %v235 = vld [vmem:[%s201 + $0x4c] sm:$0xf]
      %v236 = vld [vmem:[%s1] sm:$0xf]
      %v237 = vld [vmem:[%s1 + $0x4] sm:$0xf]
      %v238 = vld [vmem:[%s1 + $0x8] sm:$0xf]
      %v239 = vld [vmem:[%s1 + $0xc] sm:$0xf]
      %v240 = vld [vmem:[%s1 + $0x10] sm:$0xf]
      %v241 = vld [vmem:[%s1 + $0x14] sm:$0xf]
      %v242 = vld [vmem:[%s1 + $0x18] sm:$0xf]
      %v243 = vld [vmem:[%s1 + $0x1c] sm:$0xf]
      %v244 = vld [vmem:[%s1 + $0x20] sm:$0xf]
      %v245 = vld [vmem:[%s1 + $0x24] sm:$0xf]
      %v246 = vld [vmem:[%s1 + $0x28] sm:$0xf]
      %v247 = vld [vmem:[%s1 + $0x2c] sm:$0xf]
      %v248 = vld [vmem:[%s1 + $0x30] sm:$0xf]
      %v249 = vld [vmem:[%s1 + $0x34] sm:$0xf]
      %v250 = vld [vmem:[%s1 + $0x38] sm:$0xf]
      %v251 = vld [vmem:[%s1 + $0x3c] sm:$0xf]
      %v252 = vld [vmem:[%s2] sm:$0x1]
      %v254 = vlaneseq
      %v255 = vshrl.u32 %v254, 7
      %v256 = vsub.s32 0, %v255
      %v257 = vrot.slane %v252, %v256
      %v279 = vunpack.c.l.b16 %v216
      %v280 = vunpack.c.l.b16 %v217
      %v281 = vunpack.c.l.b16 %v218
      %v282 = vunpack.c.l.b16 %v219
      %v283 = vunpack.c.l.b16 %v220
      %v284 = vunpack.c.l.b16 %v221
      %v285 = vunpack.c.l.b16 %v222
      %v286 = vunpack.c.l.b16 %v223
      %v287 = vunpack.c.l.b16 %v224
      %v288 = vunpack.c.l.b16 %v225
      %v289 = vunpack.c.l.b16 %v226
      %v290 = vunpack.c.l.b16 %v227
      %v291 = vunpack.c.l.b16 %v228
      %v292 = vunpack.c.l.b16 %v229
      %v293 = vunpack.c.l.b16 %v230
      %v294 = vunpack.c.l.b16 %v231
      %v295 = vunpack.c.l.b16 %v232
      %v296 = vunpack.c.l.b16 %v233
      %v297 = vunpack.c.l.b16 %v234
      %v298 = vunpack.c.l.b16 %v235
      %v299 = vpack.c.b16 %v280, %v279
      %v300 = vpack.c.b16 %v282, %v281
      %v301 = vpack.c.b16 %v284, %v283
      %v302 = vpack.c.b16 %v286, %v285
      %v303 = vpack.c.b16 %v288, %v287
      %v304 = vpack.c.b16 %v290, %v289
      %v305 = vpack.c.b16 %v292, %v291
      %v306 = vpack.c.b16 %v294, %v293
      %v307 = vpack.c.b16 %v296, %v295
      %v308 = vpack.c.b16 %v298, %v297
      %v335 = vunpack.c.l.b16 %v236
      %v336 = vunpack.c.l.b16 %v237
      %v337 = vunpack.c.l.b16 %v238
      %v338 = vunpack.c.l.b16 %v239
      %v339 = vunpack.c.l.b16 %v240
      %v340 = vunpack.c.l.b16 %v241
      %v341 = vunpack.c.l.b16 %v242
      %v342 = vunpack.c.l.b16 %v243
      %v343 = vunpack.c.l.b16 %v244
      %v344 = vunpack.c.l.b16 %v245
      %v345 = vunpack.c.l.b16 %v246
      %v346 = vunpack.c.l.b16 %v247
      %v347 = vunpack.c.l.b16 %v248
      %v348 = vunpack.c.l.b16 %v249
      %v349 = vunpack.c.l.b16 %v250
      %v350 = vunpack.c.l.b16 %v251
      %v351 = vpack.c.b16 %v336, %v335
      %v352 = vpack.c.b16 %v338, %v337
      %v353 = vpack.c.b16 %v340, %v339
      %v354 = vpack.c.b16 %v342, %v341
      %v355 = vpack.c.b16 %v344, %v343
      %v356 = vpack.c.b16 %v346, %v345
      %v357 = vpack.c.b16 %v348, %v347
      %v358 = vpack.c.b16 %v350, %v349
      %367 = vmatprep.subr.bf16.mxu0 0
      %368 = vmatpush1.bf16.msra.mxu0 %v351
      %369 = vmatprep.subr.bf16.mxu0 0
      %370 = vmatpush1.bf16.msra.mxu0 %v352
      %371 = vmatprep.subr.bf16.mxu0 0
      %372 = vmatpush1.bf16.msra.mxu0 %v353
      %373 = vmatprep.subr.bf16.mxu0 0
      %374 = vmatpush1.bf16.msra.mxu0 %v354
      %375 = vmatprep.subr.bf16.mxu0 0
      %376 = vmatpush1.bf16.msra.mxu0 %v355
      %377 = vmatprep.subr.bf16.mxu0 0
      %378 = vmatpush1.bf16.msra.mxu0 %v356
      %379 = vmatprep.subr.bf16.mxu0 0
      %380 = vmatpush1.bf16.msra.mxu0 %v357
      %381 = vmatprep.subr.bf16.mxu0 0
      %382 = vmatpush1.bf16.msra.mxu0 %v358
      %383 = vmatprep.subr.bf16.mxu0 0
      %384 = vmatpush1.bf16.msra.mxu0 0
      %385 = vmatprep.subr.bf16.mxu0 0
      %386 = vmatpush1.bf16.msra.mxu0 0
      %387 = vmatprep.subr.bf16.mxu0 0
      %388 = vmatpush1.bf16.msra.mxu0 0
      %389 = vmatprep.subr.bf16.mxu0 0
      %390 = vmatpush1.bf16.msra.mxu0 0
      %391 = vmatprep.subr.bf16.mxu0 0
      %392 = vmatpush1.bf16.msra.mxu0 0
      %393 = vmatprep.subr.bf16.mxu0 0
      %394 = vmatpush1.bf16.msra.mxu0 0
      %395 = vmatprep.subr.bf16.mxu0 0
      %396 = vmatpush1.bf16.msra.mxu0 0
      %397 = vmatprep.subr.bf16.mxu0 0
      %398 = vmatpush1.bf16.msra.mxu0 0
      %399 = vmatprep.mubr.bf16.mxu0 0
      %400 = vmatmul.mubr.bf16.gmra.mrb[0].mxu0 %v299
      %v401 = vpop.f32.mrb[0].mxu0
      %v402 = vadd.f32 %v257, %v401
      %v403 = vpop.f32.mrb[0].mxu0
      %v404 = vpop.f32.mrb[0].mxu0
      %v405 = vadd.f32 %v257, %v404
      %v406 = vpop.f32.mrb[0].mxu0
      %407 = vmatprep.mubr.bf16.mxu0 0
      %408 = vmatmul.mubr.bf16.gmra.mrb[0].mxu0 %v300
      %v409 = vpop.f32.mrb[0].mxu0
      %v410 = vadd.f32 %v257, %v409
      %v411 = vpop.f32.mrb[0].mxu0
      %v412 = vpop.f32.mrb[0].mxu0
      %v413 = vadd.f32 %v257, %v412
      %v414 = vpop.f32.mrb[0].mxu0
      %415 = vmatprep.mubr.bf16.mxu0 0
      %416 = vmatmul.mubr.bf16.gmra.mrb[0].mxu0 %v301
      %v417 = vpop.f32.mrb[0].mxu0
      %v418 = vadd.f32 %v257, %v417
      %v419 = vpop.f32.mrb[0].mxu0
      %v420 = vpop.f32.mrb[0].mxu0
      %v421 = vadd.f32 %v257, %v420
      %v422 = vpop.f32.mrb[0].mxu0
      %423 = vmatprep.mubr.bf16.mxu0 0
      %424 = vmatmul.mubr.bf16.gmra.mrb[0].mxu0 %v302
      %v425 = vpop.f32.mrb[0].mxu0
      %v426 = vadd.f32 %v257, %v425
      %v427 = vpop.f32.mrb[0].mxu0
      %v428 = vpop.f32.mrb[0].mxu0
      %v429 = vadd.f32 %v257, %v428
      %v430 = vpop.f32.mrb[0].mxu0
      %431 = vmatprep.mubr.bf16.mxu0 0
      %432 = vmatmul.mubr.bf16.gmra.mrb[0].mxu0 %v303
      %v433 = vpop.f32.mrb[0].mxu0
      %v434 = vadd.f32 %v257, %v433
      %v435 = vpop.f32.mrb[0].mxu0
      %v436 = vpop.f32.mrb[0].mxu0
      %v437 = vadd.f32 %v257, %v436
      %v438 = vpop.f32.mrb[0].mxu0
      %439 = vmatprep.mubr.bf16.mxu0 0
      %440 = vmatmul.mubr.bf16.gmra.mrb[0].mxu0 %v304
      %v441 = vpop.f32.mrb[0].mxu0
      %v442 = vadd.f32 %v257, %v441
      %v443 = vpop.f32.mrb[0].mxu0
      %v444 = vpop.f32.mrb[0].mxu0
      %v445 = vadd.f32 %v257, %v444
      %v446 = vpop.f32.mrb[0].mxu0
      %447 = vmatprep.mubr.bf16.mxu0 0
      %448 = vmatmul.mubr.bf16.gmra.mrb[0].mxu0 %v305
      %v449 = vpop.f32.mrb[0].mxu0
      %v450 = vadd.f32 %v257, %v449
      %v451 = vpop.f32.mrb[0].mxu0
      %v452 = vpop.f32.mrb[0].mxu0
      %v453 = vadd.f32 %v257, %v452
      %v454 = vpop.f32.mrb[0].mxu0
      %455 = vmatprep.mubr.bf16.mxu0 0
      %456 = vmatmul.mubr.bf16.gmra.mrb[0].mxu0 %v306
      %v457 = vpop.f32.mrb[0].mxu0
      %v458 = vadd.f32 %v257, %v457
      %v459 = vpop.f32.mrb[0].mxu0
      %v460 = vpop.f32.mrb[0].mxu0
      %v461 = vadd.f32 %v257, %v460
      %v462 = vpop.f32.mrb[0].mxu0
      %463 = vmatprep.mubr.bf16.mxu0 0
      %464 = vmatmul.mubr.bf16.gmra.mrb[0].mxu0 %v307
      %v465 = vpop.f32.mrb[0].mxu0
      %v466 = vadd.f32 %v257, %v465
      %v467 = vpop.f32.mrb[0].mxu0
      %v468 = vpop.f32.mrb[0].mxu0
      %v469 = vadd.f32 %v257, %v468
      %v470 = vpop.f32.mrb[0].mxu0
      %471 = vmatprep.mubr.bf16.mxu0 0
      %472 = vmatmul.mubr.bf16.gmra.mrb[0].mxu0 %v308
      %v473 = vpop.f32.mrb[0].mxu0
      %v474 = vadd.f32 %v257, %v473
      %v475 = vpop.f32.mrb[0].mxu0
      %v476 = vpop.f32.mrb[0].mxu0
      %v477 = vadd.f32 %v257, %v476
      %v478 = vpop.f32.mrb[0].mxu0
      %479 = vdwg.mxu0
      %v480 = vand.u32 2147483647, %v402
      %v481 = vand.u32 2147483647, %v405
      %v482 = vand.u32 2147483647, %v410
      %v483 = vand.u32 2147483647, %v413
      %v484 = vand.u32 2147483647, %v418
      %v485 = vand.u32 2147483647, %v421
      %v486 = vand.u32 2147483647, %v426
      %v487 = vand.u32 2147483647, %v429
      %v488 = vand.u32 2147483647, %v434
      %v489 = vand.u32 2147483647, %v437
      %v490 = vand.u32 2147483647, %v442
      %v491 = vand.u32 2147483647, %v445
      %v492 = vand.u32 2147483647, %v450
      %v493 = vand.u32 2147483647, %v453
      %v494 = vand.u32 2147483647, %v458
      %v495 = vand.u32 2147483647, %v461
      %v496 = vand.u32 2147483647, %v466
      %v497 = vand.u32 2147483647, %v469
      %v498 = vand.u32 2147483647, %v474
      %v499 = vand.u32 2147483647, %v477
      %v500 = vsub.f32 0.0, %v480
      %v501 = vsub.f32 0.0, %v481
      %v502 = vsub.f32 0.0, %v482
      %v503 = vsub.f32 0.0, %v483
      %v504 = vsub.f32 0.0, %v484
      %v505 = vsub.f32 0.0, %v485
      %v506 = vsub.f32 0.0, %v486
      %v507 = vsub.f32 0.0, %v487
      %v508 = vsub.f32 0.0, %v488
      %v509 = vsub.f32 0.0, %v489
      %v510 = vsub.f32 0.0, %v490
      %v511 = vsub.f32 0.0, %v491
      %v512 = vsub.f32 0.0, %v492
      %v513 = vsub.f32 0.0, %v493
      %v514 = vsub.f32 0.0, %v494
      %v515 = vsub.f32 0.0, %v495
      %v516 = vsub.f32 0.0, %v496
      %v517 = vsub.f32 0.0, %v497
      %v518 = vsub.f32 0.0, %v498
      %v519 = vsub.f32 0.0, %v499
      %v520 = vmul.f32 %v500, 1.442695
      %v521 = vpow.pop %v520
      %v522 = vmul.f32 %v501, 1.442695
      %v523 = vpow.pop %v522
      %v524 = vmul.f32 %v502, 1.442695
      %v525 = vpow.pop %v524
      %v526 = vmul.f32 %v503, 1.442695
      %v527 = vpow.pop %v526
      %v528 = vmul.f32 %v504, 1.442695
      %v529 = vpow.pop %v528
      %v530 = vmul.f32 %v505, 1.442695
      %v531 = vpow.pop %v530
      %v532 = vmul.f32 %v506, 1.442695
      %v533 = vpow.pop %v532
      %v534 = vmul.f32 %v507, 1.442695
      %v535 = vpow.pop %v534
      %v536 = vmul.f32 %v508, 1.442695
      %v537 = vpow.pop %v536
      %v538 = vmul.f32 %v509, 1.442695
      %v539 = vpow.pop %v538
      %v540 = vmul.f32 %v510, 1.442695
      %v541 = vpow.pop %v540
      %v542 = vmul.f32 %v511, 1.442695
      %v543 = vpow.pop %v542
      %v544 = vmul.f32 %v512, 1.442695
      %v545 = vpow.pop %v544
      %v546 = vmul.f32 %v513, 1.442695
      %v547 = vpow.pop %v546
      %v548 = vmul.f32 %v514, 1.442695
      %v549 = vpow.pop %v548
      %v550 = vmul.f32 %v515, 1.442695
      %v551 = vpow.pop %v550
      %v552 = vmul.f32 %v516, 1.442695
      %v553 = vpow.pop %v552
      %v554 = vmul.f32 %v517, 1.442695
      %v555 = vpow.pop %v554
      %v556 = vmul.f32 %v518, 1.442695
      %v557 = vpow.pop %v556
      %v558 = vmul.f32 %v519, 1.442695
      %v559 = vpow.pop %v558
      %v560 = vadd.f32 %v521, 1.0
      %v561 = vadd.f32 %v523, 1.0
      %v562 = vadd.f32 %v525, 1.0
      %v563 = vadd.f32 %v527, 1.0
      %v564 = vadd.f32 %v529, 1.0
      %v565 = vadd.f32 %v531, 1.0
      %v566 = vadd.f32 %v533, 1.0
      %v567 = vadd.f32 %v535, 1.0
      %v568 = vadd.f32 %v537, 1.0
      %v569 = vadd.f32 %v539, 1.0
      %v570 = vadd.f32 %v541, 1.0
      %v571 = vadd.f32 %v543, 1.0
      %v572 = vadd.f32 %v545, 1.0
      %v573 = vadd.f32 %v547, 1.0
      %v574 = vadd.f32 %v549, 1.0
      %v575 = vadd.f32 %v551, 1.0
      %v576 = vadd.f32 %v553, 1.0
      %v577 = vadd.f32 %v555, 1.0
      %v578 = vadd.f32 %v557, 1.0
      %v579 = vadd.f32 %v559, 1.0
      %v580 = vrcp.pop %v560
      %v581 = vrcp.pop %v561
      %v582 = vrcp.pop %v562
      %v583 = vrcp.pop %v563
      %v584 = vrcp.pop %v564
      %v585 = vrcp.pop %v565
      %v586 = vrcp.pop %v566
      %v587 = vrcp.pop %v567
      %v588 = vrcp.pop %v568
      %v589 = vrcp.pop %v569
      %v590 = vrcp.pop %v570
      %v591 = vrcp.pop %v571
      %v592 = vrcp.pop %v572
      %v593 = vrcp.pop %v573
      %v594 = vrcp.pop %v574
      %v595 = vrcp.pop %v575
      %v596 = vrcp.pop %v576
      %v597 = vrcp.pop %v577
      %v598 = vrcp.pop %v578
      %v599 = vrcp.pop %v579
      %vm600 = vcmp.ge.f32.partialorder %v402, 0.0
      %vm601 = vcmp.ge.f32.partialorder %v405, 0.0
      %vm602 = vcmp.ge.f32.partialorder %v410, 0.0
      %vm603 = vcmp.ge.f32.partialorder %v413, 0.0
      %vm604 = vcmp.ge.f32.partialorder %v418, 0.0
      %vm605 = vcmp.ge.f32.partialorder %v421, 0.0
      %vm606 = vcmp.ge.f32.partialorder %v426, 0.0
      %vm607 = vcmp.ge.f32.partialorder %v429, 0.0
      %vm608 = vcmp.ge.f32.partialorder %v434, 0.0
      %vm609 = vcmp.ge.f32.partialorder %v437, 0.0
      %vm610 = vcmp.ge.f32.partialorder %v442, 0.0
      %vm611 = vcmp.ge.f32.partialorder %v445, 0.0
      %vm612 = vcmp.ge.f32.partialorder %v450, 0.0
      %vm613 = vcmp.ge.f32.partialorder %v453, 0.0
      %vm614 = vcmp.ge.f32.partialorder %v458, 0.0
      %vm615 = vcmp.ge.f32.partialorder %v461, 0.0
      %vm616 = vcmp.ge.f32.partialorder %v466, 0.0
      %vm617 = vcmp.ge.f32.partialorder %v469, 0.0
      %vm618 = vcmp.ge.f32.partialorder %v474, 0.0
      %vm619 = vcmp.ge.f32.partialorder %v477, 0.0
      %v620 = vsel %vm600, 1.0, %v521
      %v621 = vsel %vm601, 1.0, %v523
      %v622 = vsel %vm602, 1.0, %v525
      %v623 = vsel %vm603, 1.0, %v527
      %v624 = vsel %vm604, 1.0, %v529
      %v625 = vsel %vm605, 1.0, %v531
      %v626 = vsel %vm606, 1.0, %v533
      %v627 = vsel %vm607, 1.0, %v535
      %v628 = vsel %vm608, 1.0, %v537
      %v629 = vsel %vm609, 1.0, %v539
      %v630 = vsel %vm610, 1.0, %v541
      %v631 = vsel %vm611, 1.0, %v543
      %v632 = vsel %vm612, 1.0, %v545
      %v633 = vsel %vm613, 1.0, %v547
      %v634 = vsel %vm614, 1.0, %v549
      %v635 = vsel %vm615, 1.0, %v551
      %v636 = vsel %vm616, 1.0, %v553
      %v637 = vsel %vm617, 1.0, %v555
      %v638 = vsel %vm618, 1.0, %v557
      %v639 = vsel %vm619, 1.0, %v559
      %v640 = vmul.f32 %v620, %v580
      %v641 = vmul.f32 %v621, %v581
      %v642 = vmul.f32 %v622, %v582
      %v643 = vmul.f32 %v623, %v583
      %v644 = vmul.f32 %v624, %v584
      %v645 = vmul.f32 %v625, %v585
      %v646 = vmul.f32 %v626, %v586
      %v647 = vmul.f32 %v627, %v587
      %v648 = vmul.f32 %v628, %v588
      %v649 = vmul.f32 %v629, %v589
      %v650 = vmul.f32 %v630, %v590
      %v651 = vmul.f32 %v631, %v591
      %v652 = vmul.f32 %v632, %v592
      %v653 = vmul.f32 %v633, %v593
      %v654 = vmul.f32 %v634, %v594
      %v655 = vmul.f32 %v635, %v595
      %v656 = vmul.f32 %v636, %v596
      %v657 = vmul.f32 %v637, %v597
      %v658 = vmul.f32 %v638, %v598
      %v659 = vmul.f32 %v639, %v599
      %v660 = vpack.c.bf16 %v641, %v640
      %v661 = vpack.c.bf16 %v643, %v642
      %v662 = vpack.c.bf16 %v645, %v644
      %v663 = vpack.c.bf16 %v647, %v646
      %v664 = vpack.c.bf16 %v649, %v648
      %v665 = vpack.c.bf16 %v651, %v650
      %v666 = vpack.c.bf16 %v653, %v652
      %v667 = vpack.c.bf16 %v655, %v654
      %v668 = vpack.c.bf16 %v657, %v656
      %v669 = vpack.c.bf16 %v659, %v658
      %v680 = vunpack.c.l.b16 %v660
      %v681 = vunpack.c.h.b16 %v660
      %v682 = vunpack.c.l.b16 %v661
      %v683 = vunpack.c.h.b16 %v661
      %v684 = vunpack.c.l.b16 %v662
      %v685 = vunpack.c.h.b16 %v662
      %v686 = vunpack.c.l.b16 %v663
      %v687 = vunpack.c.h.b16 %v663
      %v688 = vunpack.c.l.b16 %v664
      %v689 = vunpack.c.h.b16 %v664
      %v690 = vunpack.c.l.b16 %v665
      %v691 = vunpack.c.h.b16 %v665
      %v692 = vunpack.c.l.b16 %v666
      %v693 = vunpack.c.h.b16 %v666
      %v694 = vunpack.c.l.b16 %v667
      %v695 = vunpack.c.h.b16 %v667
      %v696 = vunpack.c.l.b16 %v668
      %v697 = vunpack.c.h.b16 %v668
      %v698 = vunpack.c.l.b16 %v669
      %v699 = vunpack.c.h.b16 %v669
      %v700 = vpack.c.b16 %v680, %v680
      %v701 = vpack.c.b16 %v681, %v681
      %v702 = vpack.c.b16 %v682, %v682
      %v703 = vpack.c.b16 %v683, %v683
      %v704 = vpack.c.b16 %v684, %v684
      %v705 = vpack.c.b16 %v685, %v685
      %v706 = vpack.c.b16 %v686, %v686
      %v707 = vpack.c.b16 %v687, %v687
      %v708 = vpack.c.b16 %v688, %v688
      %v709 = vpack.c.b16 %v689, %v689
      %v710 = vpack.c.b16 %v690, %v690
      %v711 = vpack.c.b16 %v691, %v691
      %v712 = vpack.c.b16 %v692, %v692
      %v713 = vpack.c.b16 %v693, %v693
      %v714 = vpack.c.b16 %v694, %v694
      %v715 = vpack.c.b16 %v695, %v695
      %v716 = vpack.c.b16 %v696, %v696
      %v717 = vpack.c.b16 %v697, %v697
      %v718 = vpack.c.b16 %v698, %v698
      %v719 = vpack.c.b16 %v699, %v699
      %740 = vst [vmem:[%s207] sm:$0xf] %v700
      %741 = vst [vmem:[%s207 + $0x4] sm:$0xf] %v701
      %742 = vst [vmem:[%s207 + $0x8] sm:$0xf] %v702
      %743 = vst [vmem:[%s207 + $0xc] sm:$0xf] %v703
      %744 = vst [vmem:[%s207 + $0x10] sm:$0xf] %v704
      %745 = vst [vmem:[%s207 + $0x14] sm:$0xf] %v705
      %746 = vst [vmem:[%s207 + $0x18] sm:$0xf] %v706
      %747 = vst [vmem:[%s207 + $0x1c] sm:$0xf] %v707
      %748 = vst [vmem:[%s207 + $0x20] sm:$0xf] %v708
      %749 = vst [vmem:[%s207 + $0x24] sm:$0xf] %v709
      %750 = vst [vmem:[%s207 + $0x28] sm:$0xf] %v710
      %751 = vst [vmem:[%s207 + $0x2c] sm:$0xf] %v711
      %752 = vst [vmem:[%s207 + $0x30] sm:$0xf] %v712
      %753 = vst [vmem:[%s207 + $0x34] sm:$0xf] %v713
      %754 = vst [vmem:[%s207 + $0x38] sm:$0xf] %v714
      %755 = vst [vmem:[%s207 + $0x3c] sm:$0xf] %v715
      %756 = vst [vmem:[%s207 + $0x40] sm:$0xf] %v716
      %757 = vst [vmem:[%s207 + $0x44] sm:$0xf] %v717
      %758 = vst [vmem:[%s207 + $0x48] sm:$0xf] %v718
      %759 = vst [vmem:[%s207 + $0x4c] sm:$0xf] %v719
      %v760 = vunpack.c.l.bf16 %v216
      %v761 = vunpack.c.l.bf16 %v217
      %v762 = vunpack.c.l.bf16 %v218
      %v763 = vunpack.c.l.bf16 %v219
      %v764 = vunpack.c.l.bf16 %v220
      %v765 = vunpack.c.l.bf16 %v221
      %v766 = vunpack.c.l.bf16 %v222
      %v767 = vunpack.c.l.bf16 %v223
      %v768 = vunpack.c.l.bf16 %v224
      %v769 = vunpack.c.l.bf16 %v225
      %v770 = vunpack.c.l.bf16 %v226
      %v771 = vunpack.c.l.bf16 %v227
      %v772 = vunpack.c.l.bf16 %v228
      %v773 = vunpack.c.l.bf16 %v229
      %v774 = vunpack.c.l.bf16 %v230
      %v775 = vunpack.c.l.bf16 %v231
      %v776 = vunpack.c.l.bf16 %v232
      %v777 = vunpack.c.l.bf16 %v233
      %v778 = vunpack.c.l.bf16 %v234
      %v779 = vunpack.c.l.bf16 %v235
      %v780 = vmul.f32 %v760, %v402
      %v781 = vmul.f32 %v761, %v405
      %v782 = vmul.f32 %v762, %v410
      %v783 = vmul.f32 %v763, %v413
      %v784 = vmul.f32 %v764, %v418
      %v785 = vmul.f32 %v765, %v421
      %v786 = vmul.f32 %v766, %v426
      %v787 = vmul.f32 %v767, %v429
      %v788 = vmul.f32 %v768, %v434
      %v789 = vmul.f32 %v769, %v437
      %v790 = vmul.f32 %v770, %v442
      %v791 = vmul.f32 %v771, %v445
      %v792 = vmul.f32 %v772, %v450
      %v793 = vmul.f32 %v773, %v453
      %v794 = vmul.f32 %v774, %v458
      %v795 = vmul.f32 %v775, %v461
      %v796 = vmul.f32 %v776, %v466
      %v797 = vmul.f32 %v777, %v469
      %v798 = vmul.f32 %v778, %v474
      %v799 = vmul.f32 %v779, %v477
      %v800 = vmin.f32 %v780, 0.0
      %v801 = vmin.f32 %v781, 0.0
      %v802 = vmin.f32 %v782, 0.0
      %v803 = vmin.f32 %v783, 0.0
      %v804 = vmin.f32 %v784, 0.0
      %v805 = vmin.f32 %v785, 0.0
      %v806 = vmin.f32 %v786, 0.0
      %v807 = vmin.f32 %v787, 0.0
      %v808 = vmin.f32 %v788, 0.0
      %v809 = vmin.f32 %v789, 0.0
      %v810 = vmin.f32 %v790, 0.0
      %v811 = vmin.f32 %v791, 0.0
      %v812 = vmin.f32 %v792, 0.0
      %v813 = vmin.f32 %v793, 0.0
      %v814 = vmin.f32 %v794, 0.0
      %v815 = vmin.f32 %v795, 0.0
      %v816 = vmin.f32 %v796, 0.0
      %v817 = vmin.f32 %v797, 0.0
      %v818 = vmin.f32 %v798, 0.0
      %v819 = vmin.f32 %v799, 0.0
      %v820 = vadd.f32 %v521, 1.0
      %v821 = vlog2.pop %v820
      %v822 = vmul.f32 %v821, 0.6931472
      %v823 = vmul.f32 -0.5, %v521
      %v824 = vadd.f32 %v823, 1.0
      %v825 = vmul.f32 %v824, %v521
      %v826 = vand.u32 2147483647, %v521
      %vm827 = vcmp.lt.f32.partialorder %v826, 0.0004427343
      %v828 = vsel %vm827, %v825, %v822
      %v829 = vadd.f32 %v523, 1.0
      %v830 = vlog2.pop %v829
      %v831 = vmul.f32 %v830, 0.6931472
      %v832 = vmul.f32 -0.5, %v523
      %v833 = vadd.f32 %v832, 1.0
      %v834 = vmul.f32 %v833, %v523
      %v835 = vand.u32 2147483647, %v523
      %vm836 = vcmp.lt.f32.partialorder %v835, 0.0004427343
      %v837 = vsel %vm836, %v834, %v831
      %v838 = vadd.f32 %v525, 1.0
      %v839 = vlog2.pop %v838
      %v840 = vmul.f32 %v839, 0.6931472
      %v841 = vmul.f32 -0.5, %v525
      %v842 = vadd.f32 %v841, 1.0
      %v843 = vmul.f32 %v842, %v525
      %v844 = vand.u32 2147483647, %v525
      %vm845 = vcmp.lt.f32.partialorder %v844, 0.0004427343
      %v846 = vsel %vm845, %v843, %v840
      %v847 = vadd.f32 %v527, 1.0
      %v848 = vlog2.pop %v847
      %v849 = vmul.f32 %v848, 0.6931472
      %v850 = vmul.f32 -0.5, %v527
      %v851 = vadd.f32 %v850, 1.0
      %v852 = vmul.f32 %v851, %v527
      %v853 = vand.u32 2147483647, %v527
      %vm854 = vcmp.lt.f32.partialorder %v853, 0.0004427343
      %v855 = vsel %vm854, %v852, %v849
      %v856 = vadd.f32 %v529, 1.0
      %v857 = vlog2.pop %v856
      %v858 = vmul.f32 %v857, 0.6931472
      %v859 = vmul.f32 -0.5, %v529
      %v860 = vadd.f32 %v859, 1.0
      %v861 = vmul.f32 %v860, %v529
      %v862 = vand.u32 2147483647, %v529
      %vm863 = vcmp.lt.f32.partialorder %v862, 0.0004427343
      %v864 = vsel %vm863, %v861, %v858
      %v865 = vadd.f32 %v531, 1.0
      %v866 = vlog2.pop %v865
      %v867 = vmul.f32 %v866, 0.6931472
      %v868 = vmul.f32 -0.5, %v531
      %v869 = vadd.f32 %v868, 1.0
      %v870 = vmul.f32 %v869, %v531
      %v871 = vand.u32 2147483647, %v531
      %vm872 = vcmp.lt.f32.partialorder %v871, 0.0004427343
      %v873 = vsel %vm872, %v870, %v867
      %v874 = vadd.f32 %v533, 1.0
      %v875 = vlog2.pop %v874
      %v876 = vmul.f32 %v875, 0.6931472
      %v877 = vmul.f32 -0.5, %v533
      %v878 = vadd.f32 %v877, 1.0
      %v879 = vmul.f32 %v878, %v533
      %v880 = vand.u32 2147483647, %v533
      %vm881 = vcmp.lt.f32.partialorder %v880, 0.0004427343
      %v882 = vsel %vm881, %v879, %v876
      %v883 = vadd.f32 %v535, 1.0
      %v884 = vlog2.pop %v883
      %v885 = vmul.f32 %v884, 0.6931472
      %v886 = vmul.f32 -0.5, %v535
      %v887 = vadd.f32 %v886, 1.0
      %v888 = vmul.f32 %v887, %v535
      %v889 = vand.u32 2147483647, %v535
      %vm890 = vcmp.lt.f32.partialorder %v889, 0.0004427343
      %v891 = vsel %vm890, %v888, %v885
      %v892 = vadd.f32 %v537, 1.0
      %v893 = vlog2.pop %v892
      %v894 = vmul.f32 %v893, 0.6931472
      %v895 = vmul.f32 -0.5, %v537
      %v896 = vadd.f32 %v895, 1.0
      %v897 = vmul.f32 %v896, %v537
      %v898 = vand.u32 2147483647, %v537
      %vm899 = vcmp.lt.f32.partialorder %v898, 0.0004427343
      %v900 = vsel %vm899, %v897, %v894
      %v901 = vadd.f32 %v539, 1.0
      %v902 = vlog2.pop %v901
      %v903 = vmul.f32 %v902, 0.6931472
      %v904 = vmul.f32 -0.5, %v539
      %v905 = vadd.f32 %v904, 1.0
      %v906 = vmul.f32 %v905, %v539
      %v907 = vand.u32 2147483647, %v539
      %vm908 = vcmp.lt.f32.partialorder %v907, 0.0004427343
      %v909 = vsel %vm908, %v906, %v903
      %v910 = vadd.f32 %v541, 1.0
      %v911 = vlog2.pop %v910
      %v912 = vmul.f32 %v911, 0.6931472
      %v913 = vmul.f32 -0.5, %v541
      %v914 = vadd.f32 %v913, 1.0
      %v915 = vmul.f32 %v914, %v541
      %v916 = vand.u32 2147483647, %v541
      %vm917 = vcmp.lt.f32.partialorder %v916, 0.0004427343
      %v918 = vsel %vm917, %v915, %v912
      %v919 = vadd.f32 %v543, 1.0
      %v920 = vlog2.pop %v919
      %v921 = vmul.f32 %v920, 0.6931472
      %v922 = vmul.f32 -0.5, %v543
      %v923 = vadd.f32 %v922, 1.0
      %v924 = vmul.f32 %v923, %v543
      %v925 = vand.u32 2147483647, %v543
      %vm926 = vcmp.lt.f32.partialorder %v925, 0.0004427343
      %v927 = vsel %vm926, %v924, %v921
      %v928 = vadd.f32 %v545, 1.0
      %v929 = vlog2.pop %v928
      %v930 = vmul.f32 %v929, 0.6931472
      %v931 = vmul.f32 -0.5, %v545
      %v932 = vadd.f32 %v931, 1.0
      %v933 = vmul.f32 %v932, %v545
      %v934 = vand.u32 2147483647, %v545
      %vm935 = vcmp.lt.f32.partialorder %v934, 0.0004427343
      %v936 = vsel %vm935, %v933, %v930
      %v937 = vadd.f32 %v547, 1.0
      %v938 = vlog2.pop %v937
      %v939 = vmul.f32 %v938, 0.6931472
      %v940 = vmul.f32 -0.5, %v547
      %v941 = vadd.f32 %v940, 1.0
      %v942 = vmul.f32 %v941, %v547
      %v943 = vand.u32 2147483647, %v547
      %vm944 = vcmp.lt.f32.partialorder %v943, 0.0004427343
      %v945 = vsel %vm944, %v942, %v939
      %v946 = vadd.f32 %v549, 1.0
      %v947 = vlog2.pop %v946
      %v948 = vmul.f32 %v947, 0.6931472
      %v949 = vmul.f32 -0.5, %v549
      %v950 = vadd.f32 %v949, 1.0
      %v951 = vmul.f32 %v950, %v549
      %v952 = vand.u32 2147483647, %v549
      %vm953 = vcmp.lt.f32.partialorder %v952, 0.0004427343
      %v954 = vsel %vm953, %v951, %v948
      %v955 = vadd.f32 %v551, 1.0
      %v956 = vlog2.pop %v955
      %v957 = vmul.f32 %v956, 0.6931472
      %v958 = vmul.f32 -0.5, %v551
      %v959 = vadd.f32 %v958, 1.0
      %v960 = vmul.f32 %v959, %v551
      %v961 = vand.u32 2147483647, %v551
      %vm962 = vcmp.lt.f32.partialorder %v961, 0.0004427343
      %v963 = vsel %vm962, %v960, %v957
      %v964 = vadd.f32 %v553, 1.0
      %v965 = vlog2.pop %v964
      %v966 = vmul.f32 %v965, 0.6931472
      %v967 = vmul.f32 -0.5, %v553
      %v968 = vadd.f32 %v967, 1.0
      %v969 = vmul.f32 %v968, %v553
      %v970 = vand.u32 2147483647, %v553
      %vm971 = vcmp.lt.f32.partialorder %v970, 0.0004427343
      %v972 = vsel %vm971, %v969, %v966
      %v973 = vadd.f32 %v555, 1.0
      %v974 = vlog2.pop %v973
      %v975 = vmul.f32 %v974, 0.6931472
      %v976 = vmul.f32 -0.5, %v555
      %v977 = vadd.f32 %v976, 1.0
      %v978 = vmul.f32 %v977, %v555
      %v979 = vand.u32 2147483647, %v555
      %vm980 = vcmp.lt.f32.partialorder %v979, 0.0004427343
      %v981 = vsel %vm980, %v978, %v975
      %v982 = vadd.f32 %v557, 1.0
      %v983 = vlog2.pop %v982
      %v984 = vmul.f32 %v983, 0.6931472
      %v985 = vmul.f32 -0.5, %v557
      %v986 = vadd.f32 %v985, 1.0
      %v987 = vmul.f32 %v986, %v557
      %v988 = vand.u32 2147483647, %v557
      %vm989 = vcmp.lt.f32.partialorder %v988, 0.0004427343
      %v990 = vsel %vm989, %v987, %v984
      %v991 = vadd.f32 %v559, 1.0
      %v992 = vlog2.pop %v991
      %v993 = vmul.f32 %v992, 0.6931472
      %v994 = vmul.f32 -0.5, %v559
      %v995 = vadd.f32 %v994, 1.0
      %v996 = vmul.f32 %v995, %v559
      %v997 = vand.u32 2147483647, %v559
      %vm998 = vcmp.lt.f32.partialorder %v997, 0.0004427343
      %v999 = vsel %vm998, %v996, %v993
      %v1000 = vsub.f32 %v800, %v828
      %v1001 = vsub.f32 %v801, %v837
      %v1002 = vsub.f32 %v802, %v846
      %v1003 = vsub.f32 %v803, %v855
      %v1004 = vsub.f32 %v804, %v864
      %v1005 = vsub.f32 %v805, %v873
      %v1006 = vsub.f32 %v806, %v882
      %v1007 = vsub.f32 %v807, %v891
      %v1008 = vsub.f32 %v808, %v900
      %v1009 = vsub.f32 %v809, %v909
      %v1010 = vsub.f32 %v810, %v918
      %v1011 = vsub.f32 %v811, %v927
      %v1012 = vsub.f32 %v812, %v936
      %v1013 = vsub.f32 %v813, %v945
      %v1014 = vsub.f32 %v814, %v954
      %v1015 = vsub.f32 %v815, %v963
      %v1016 = vsub.f32 %v816, %v972
      %v1017 = vsub.f32 %v817, %v981
      %v1018 = vsub.f32 %v818, %v990
      %v1019 = vsub.f32 %v819, %v999
      %1020 = vadd.xlane.f32.xlu0 %v1000
      %v1021 = vpop.xlane.xlu0 %1020
      %1022 = vadd.xlane.f32.xlu0 %v1001
      %v1023 = vpop.xlane.xlu0 %1022
      %1024 = vadd.xlane.f32.xlu0 %v1002
      %v1025 = vpop.xlane.xlu0 %1024
      %1026 = vadd.xlane.f32.xlu0 %v1003
      %v1027 = vpop.xlane.xlu0 %1026
      %1028 = vadd.xlane.f32.xlu0 %v1004
      %v1029 = vpop.xlane.xlu0 %1028
      %1030 = vadd.xlane.f32.xlu0 %v1005
      %v1031 = vpop.xlane.xlu0 %1030
      %1032 = vadd.xlane.f32.xlu0 %v1006
      %v1033 = vpop.xlane.xlu0 %1032
      %1034 = vadd.xlane.f32.xlu0 %v1007
      %v1035 = vpop.xlane.xlu0 %1034
      %1036 = vadd.xlane.f32.xlu0 %v1008
      %v1037 = vpop.xlane.xlu0 %1036
      %1038 = vadd.xlane.f32.xlu0 %v1009
      %v1039 = vpop.xlane.xlu0 %1038
      %1040 = vadd.xlane.f32.xlu0 %v1010
      %v1041 = vpop.xlane.xlu0 %1040
      %1042 = vadd.xlane.f32.xlu0 %v1011
      %v1043 = vpop.xlane.xlu0 %1042
      %1044 = vadd.xlane.f32.xlu0 %v1012
      %v1045 = vpop.xlane.xlu0 %1044
      %1046 = vadd.xlane.f32.xlu0 %v1013
      %v1047 = vpop.xlane.xlu0 %1046
      %1048 = vadd.xlane.f32.xlu0 %v1014
      %v1049 = vpop.xlane.xlu0 %1048
      %1050 = vadd.xlane.f32.xlu0 %v1015
      %v1051 = vpop.xlane.xlu0 %1050
      %1052 = vadd.xlane.f32.xlu0 %v1016
      %v1053 = vpop.xlane.xlu0 %1052
      %1054 = vadd.xlane.f32.xlu0 %v1017
      %v1055 = vpop.xlane.xlu0 %1054
      %1056 = vadd.xlane.f32.xlu0 %v1018
      %v1057 = vpop.xlane.xlu0 %1056
      %1058 = vadd.xlane.f32.xlu0 %v1019
      %v1059 = vpop.xlane.xlu0 %1058
      %vm1060 = vcmask 7168
      %1061 = vst.msk [vmem:[%s213] sm:$0xff] %vm1060, %v1021
      %1062 = vst.msk [vmem:[%s213 + $0x8] sm:$0xff] %vm1060, %v1023
      %1063 = vst.msk [vmem:[%s213 + $0x10] sm:$0xff] %vm1060, %v1025
      %1064 = vst.msk [vmem:[%s213 + $0x18] sm:$0xff] %vm1060, %v1027
      %1065 = vst.msk [vmem:[%s213 + $0x20] sm:$0xff] %vm1060, %v1029
      %1066 = vst.msk [vmem:[%s213 + $0x28] sm:$0xff] %vm1060, %v1031
      %1067 = vst.msk [vmem:[%s213 + $0x30] sm:$0xff] %vm1060, %v1033
      %1068 = vst.msk [vmem:[%s213 + $0x38] sm:$0xff] %vm1060, %v1035
      %1069 = vst.msk [vmem:[%s213 + $0x40] sm:$0xff] %vm1060, %v1037
      %1070 = vst.msk [vmem:[%s213 + $0x48] sm:$0xff] %vm1060, %v1039
      %1071 = vst.msk [vmem:[%s213 + $0x50] sm:$0xff] %vm1060, %v1041
      %1072 = vst.msk [vmem:[%s213 + $0x58] sm:$0xff] %vm1060, %v1043
      %1073 = vst.msk [vmem:[%s213 + $0x60] sm:$0xff] %vm1060, %v1045
      %1074 = vst.msk [vmem:[%s213 + $0x68] sm:$0xff] %vm1060, %v1047
      %1075 = vst.msk [vmem:[%s213 + $0x70] sm:$0xff] %vm1060, %v1049
      %1076 = vst.msk [vmem:[%s213 + $0x78] sm:$0xff] %vm1060, %v1051
      %1077 = vst.msk [vmem:[%s213 + $0x80] sm:$0xff] %vm1060, %v1053
      %1078 = vst.msk [vmem:[%s213 + $0x88] sm:$0xff] %vm1060, %v1055
      %1079 = vst.msk [vmem:[%s213 + $0x90] sm:$0xff] %vm1060, %v1057
      %1080 = vst.msk [vmem:[%s213 + $0x98] sm:$0xff] %vm1060, %v1059
      %s1081 = smul.u32 20, %s16
      %p1082 = scmp.lt.s32.totalorder %s1081, 39
      %s1083 = scalar_select %p1082, %s1081, 39
      %s1084 = smul.addr %s1083, 4
      %s1085 = scalar_lea.vmem %s3, %s1084
      %s1086 = smul.u32 20, %s16
      %p1087 = scmp.lt.s32.totalorder %s1086, 39
      %s1088 = scalar_select %p1087, %s1086, 39
      %s1089 = smul.addr %s1088, 8
      %s1090 = scalar_lea.vmem %s4, %s1089
      // Predicated region
      $region33: #{ann_forward_log_prob.1} parent=31 // pred_check
        %p1091 = pneg %p102
      $region34: #{ann_forward_log_prob.1} parent=31 // pred_check_branch
        %1093 = sbr.rel (%p1091) target = $region36
      $region35: #{ann_forward_log_prob.1} parent=31 // pred_region
        %s1094 = smul.u32 20, %s16
      $region36: #{ann_forward_log_prob.1} parent=31 // pred_fallthru
        _
      // Predicated region
      $region37: #{ann_forward_log_prob.1} parent=31 // pred_check
        %p1095 = pneg %p128
      $region38: #{ann_forward_log_prob.1} parent=31 // pred_check_branch
        %1097 = sbr.rel (%p1095) target = $region40
      $region39: #{ann_forward_log_prob.1} parent=31 // pred_region
        %s1098 = smul.u32 20, %s16
      $region40: #{ann_forward_log_prob.1} parent=31 // pred_fallthru
        _
    $region32: #{ann_forward_log_prob.1} parent=5 // pred_fallthru
      _
    %p1099 = scmp.le.s32.totalorder 2, %s11
    // Predicated region
    $region41: #{ann_forward_log_prob.1} parent=5 // pred_check
      %p1100 = pneg %p1099
    $region42: #{ann_forward_log_prob.1} parent=5 // pred_check_branch
      %1102 = sbr.rel (%p1100) target = $region44
    $region43: #{ann_forward_log_prob.1} parent=5 // pred_region
      %s1103 = ssub.s32 %s11, 2
      // Predicated region
      $region45: #{ann_forward_log_prob.1} parent=43 // pred_check
        %p1104 = pneg %p108
      $region46: #{ann_forward_log_prob.1} parent=43 // pred_check_branch
        %1106 = sbr.rel (%p1104) target = $region48
      $region47: #{ann_forward_log_prob.1} parent=43 // pred_region
        %s1107 = smul.u32 20, %s17
        %p1108 = scmp.lt.s32.totalorder %s1107, 39
        %s1109 = scalar_select %p1108, %s1107, 39
        %s1110 = smul.addr %s1109, 4
        %s1111 = scalar_lea.vmem %s3, %s1110
      $region48: #{ann_forward_log_prob.1} parent=43 // pred_fallthru
        _
      // Predicated region
      $region49: #{ann_forward_log_prob.1} parent=43 // pred_check
        %p1112 = pneg %p134
      $region50: #{ann_forward_log_prob.1} parent=43 // pred_check_branch
        %1114 = sbr.rel (%p1112) target = $region52
      $region51: #{ann_forward_log_prob.1} parent=43 // pred_region
        %s1115 = smul.u32 20, %s17
        %p1116 = scmp.lt.s32.totalorder %s1115, 39
        %s1117 = scalar_select %p1116, %s1115, 39
        %s1118 = smul.addr %s1117, 8
        %s1119 = scalar_lea.vmem %s4, %s1118
      $region52: #{ann_forward_log_prob.1} parent=43 // pred_fallthru
        _
    $region44: #{ann_forward_log_prob.1} parent=5 // pred_fallthru
      _
  $region6: #{ann_forward_log_prob.1} parent=0 // loop_footer
    %s15 = sadd.s32 1, %s11
  $region7: #{ann_forward_log_prob.1} parent=0 // loop_footer_branch
    %10 = sbr.rel target = $region3
  $region8: #{ann_forward_log_prob.1} parent=0 // loop_exit
    _

</llo_original>
